<compile_context>
chip_gen: v6e
topology: v6e:2x2x1
jax: 0.10.0
libtpu: 0.0.40
codegen_flags: <defaults>
</compile_context>

<pallas_src>
import functools

import jax
import jax.numpy as jnp
from jax.experimental import pallas as pl
from jax.experimental.pallas import tpu as pltpu


def _gate_tile_kernel(x_ref, w_ref, b_ref, masked_ref, stats_ref, *,
                      tile_n, n_tokens, num_experts):
    # Router logits on the MXU (bf16 or f32 inputs, f32 accumulate) + bias.
    logits = jnp.dot(x_ref[...], w_ref[...],
                     preferred_element_type=jnp.float32) + b_ref[...]

    # Softmax over the (padded) expert axis; padded columns have -1e30 logits
    # so they contribute exactly 0 to the denominator.
    m = jnp.max(logits, axis=-1, keepdims=True)
    e = jnp.exp(logits - m)
    probs = e / jnp.sum(e, axis=-1, keepdims=True)            # (tile_n, E_pad)

    # Top-3 per row via three masked max passes (threshold at 3rd-largest).
    # TODO(synk): exact torch.topk tie-breaking (always exactly 3) is not
    # reproduced for exactly-tied float scores.
    neg_inf = jnp.float32(-jnp.inf)
    t1 = jnp.max(probs, axis=-1, keepdims=True)
    s2 = jnp.where(probs >= t1, neg_inf, probs)
    t2 = jnp.max(s2, axis=-1, keepdims=True)
    s3 = jnp.where(s2 >= t2, neg_inf, s2)
    t3 = jnp.max(s3, axis=-1, keepdims=True)

    expert_ids = jax.lax.broadcasted_iota(jnp.int32, probs.shape, 1)
    top3 = (probs >= t3) & (expert_ids < num_experts)
    mask = jnp.where(top3, jnp.float32(1.0), jnp.float32(0.0))

    # Zero contributions from token-padding rows (when n_tokens is not a
    # multiple of the tile) so the global sums stay exact.
    row_ids = pl.program_id(0) * tile_n + jax.lax.broadcasted_iota(
        jnp.int32, (tile_n, 1), 0)
    row_ok = jnp.where(row_ids < n_tokens, jnp.float32(1.0), jnp.float32(0.0))

    probs_v = probs * row_ok
    mask_v = mask * row_ok
    masked = probs_v * mask                                   # probs*mask*row_ok

    masked_ref[...] = masked

    # Per-tile partial sums: [masked-score cols, mask cols, prob cols].
    stats = jnp.concatenate(
        [jnp.sum(masked, axis=0, keepdims=True),
         jnp.sum(mask_v, axis=0, keepdims=True),
         jnp.sum(probs_v, axis=0, keepdims=True)], axis=0)    # (3, E_pad)
    stats_ref[...] = stats.reshape(1, 3, -1)


def _normalize_kernel(masked_ref, denom_ref, out_ref, *, capacity):
    out_ref[...] = masked_ref[...] / denom_ref[...] * jnp.float32(capacity)


def _round_up(v, m):
    return ((v + m - 1) // m) * m


def _pick_tile_n(n, dim, x_itemsize):
    # Largest of {512, 256, ...} whose double-buffered x tile stays under
    # ~24 MiB (safe on v5e / v6e / v7x VMEM budgets with headroom).
    tile = 512
    while tile > 64 and 2 * tile * dim * x_itemsize > (24 << 20):
        tile //= 2
    if n < tile:
        tile = max(8, _round_up(n, 8))
    return tile


def gate_forward(x, w_gate, b_gate, *, capacity_factor=1.0, epsilon=1e-6,
                 use_aux_loss=True):
    """x: (N, dim); w_gate: (dim, E); b_gate: (E,). Returns (gate_scores, loss)."""
    n, dim = x.shape
    num_experts = w_gate.shape[1]
    assert num_experts >= 3, "torch.topk(3) requires num_experts >= 3"
    capacity = int(capacity_factor * n)

    e_pad = _round_up(max(num_experts, 128), 128)     # lane-dense expert axis
    x_itemsize = jnp.dtype(x.dtype).itemsize
    tile_n = _pick_tile_n(n, dim, x_itemsize)
    n_pad = _round_up(n, tile_n)
    num_tiles = n_pad // tile_n

    # Pad inputs: zero x rows, zero w columns, -1e30 bias for padded experts.
    x_p = x if n_pad == n else jnp.pad(x, ((0, n_pad - n), (0, 0)))
    w_p = jnp.zeros((dim, e_pad), jnp.float32)
    w_p = w_p.at[:, :num_experts].set(w_gate.astype(jnp.float32)).astype(x.dtype)
    b_p = jnp.full((1, e_pad), -1e30, jnp.float32)
    b_p = b_p.at[0, :num_experts].set(b_gate.astype(jnp.float32))

    vmem_limit = int(min(max(
        1.5 * (2 * tile_n * dim * x_itemsize          # double-buffered x tiles
               + dim * e_pad * 4                      # resident w_gate
               + 2 * tile_n * e_pad * 4               # double-buffered masked out
               + 8 * e_pad * 4),                      # bias + stats
        16 << 20), 96 << 20))

    # Pass 1: logits -> softmax -> top-3 mask -> masked scores + partial sums.
    kernel1 = functools.partial(_gate_tile_kernel, tile_n=tile_n,
                                n_tokens=n, num_experts=num_experts)
    masked, stats = pl.pallas_call(
        kernel1,
        grid=(num_tiles,),
        in_specs=[
            pl.BlockSpec((tile_n, dim), lambda i: (i, 0)),    # stream x
            pl.BlockSpec((dim, e_pad), lambda i: (0, 0)),     # resident w
            pl.BlockSpec((1, e_pad), lambda i: (0, 0)),       # resident bias
        ],
        out_specs=(
            pl.BlockSpec((tile_n, e_pad), lambda i: (i, 0)),
            pl.BlockSpec((1, 3, e_pad), lambda i: (i, 0, 0)),
        ),
        out_shape=(
            jax.ShapeDtypeStruct((n_pad, e_pad), jnp.float32),
            jax.ShapeDtypeStruct((num_tiles, 3, e_pad), jnp.float32),
        ),
        compiler_params=pltpu.CompilerParams(
            dimension_semantics=("parallel",),
            vmem_limit_bytes=vmem_limit),
    )(x_p, w_p, b_p)

    # Tiny global reductions over the (num_tiles, 3, E_pad) stats.
    col_sum = jnp.sum(stats[:, 0, :], axis=0)       # masked-score column sums
    mask_sum = jnp.sum(stats[:, 1, :], axis=0)      # expert_mask column sums
    prob_sum = jnp.sum(stats[:, 2, :], axis=0)      # router-prob column sums

    denom = jnp.ones((1, e_pad), jnp.float32)
    denom = denom.at[0, :num_experts].set(
        col_sum[:num_experts] + jnp.float32(epsilon))

    # Pass 2: apply the global denominator and capacity scaling (lane-dense).
    kernel2 = functools.partial(_normalize_kernel, capacity=capacity)
    scores_p = pl.pallas_call(
        kernel2,
        grid=(num_tiles,),
        in_specs=[
            pl.BlockSpec((tile_n, e_pad), lambda i: (i, 0)),
            pl.BlockSpec((1, e_pad), lambda i: (0, 0)),
        ],
        out_specs=pl.BlockSpec((tile_n, e_pad), lambda i: (i, 0)),
        out_shape=jax.ShapeDtypeStruct((n_pad, e_pad), jnp.float32),
        compiler_params=pltpu.CompilerParams(
            dimension_semantics=("parallel",),
            vmem_limit_bytes=vmem_limit),
    )(masked, denom)

    gate_scores = scores_p[:n, :num_experts]

    if not use_aux_loss:
        return gate_scores, None
    density = mask_sum[:num_experts] / jnp.float32(n)
    density_proxy = prob_sum[:num_experts] / jnp.float32(n)
    loss = jnp.mean(density_proxy * density) * jnp.float32(num_experts ** 2)
    return gate_scores, loss


if __name__ == "__main__":
    # Small, forward-consistent shapes: 8 tokens, dim=32, 8 experts.
    N, DIM, E = 8, 32, 8
    key = jax.random.PRNGKey(0)
    kx, kw, kb = jax.random.split(key, 3)

    x = jax.random.normal(kx, (N, DIM), dtype=jnp.float32)
    bound = 1.0 / (DIM ** 0.5)
    w_gate = jax.random.uniform(kw, (DIM, E), jnp.float32, -bound, bound)
    b_gate = jax.random.uniform(kb, (E,), jnp.float32, -bound, bound)

    gate_scores, loss = gate_forward(x, w_gate, b_gate,
                                     capacity_factor=1.0, epsilon=1e-6)
    jax.block_until_ready((gate_scores, loss))
    assert gate_scores.shape == (N, E)
    assert loss.shape == ()

    # Pure-JAX reference mirroring the PyTorch module.
    probs = jax.nn.softmax(x @ w_gate + b_gate, axis=-1)
    _, idx = jax.lax.top_k(probs, 3)
    mask = jnp.zeros_like(probs).at[jnp.arange(N)[:, None], idx].set(1.0)
    masked = probs * mask
    denom = masked.sum(0, keepdims=True) + 1e-6
    ref_scores = masked / denom * int(1.0 * N)
    ref_loss = jnp.mean(jnp.mean(probs, 0) * jnp.mean(mask, 0)) * E ** 2

    assert jnp.allclose(gate_scores, ref_scores, rtol=1e-4, atol=1e-4), (
        float(jnp.max(jnp.abs(gate_scores - ref_scores))))
    assert jnp.allclose(loss, ref_loss, rtol=1e-4, atol=1e-4)
    print("KERNEL_OK")
</pallas_src>

<mosaic_0001>
module attributes {stable_mosaic.version = 11 : i64} {
  func.func @_gate_tile_kernel(%arg0: i32, %arg1: memref<8x32xf32, #tpu.memory_space<vmem>>, %arg2: memref<32x128xf32, #tpu.memory_space<vmem>>, %arg3: memref<1x128xf32, #tpu.memory_space<vmem>>, %arg4: memref<8x128xf32, #tpu.memory_space<vmem>>, %arg5: memref<1x3x128xf32, #tpu.memory_space<vmem>>) attributes {dimension_semantics = [#tpu.dimension_semantics<parallel>], iteration_bounds = array<i64: 1>, scalar_prefetch = 0 : i64, scratch_operands = 0 : i64, tpu.core_type = #tpu.core_type<tc>, window_params = [{transform_indices = @transform_0, window_bounds = array<i64: 8, 32>}, {pipeline_mode = #tpu.pipeline_mode<synchronous>, transform_indices = @transform_1, window_bounds = array<i64: 32, 128>}, {pipeline_mode = #tpu.pipeline_mode<synchronous>, transform_indices = @transform_2, window_bounds = array<i64: 1, 128>}, {transform_indices = @transform_3, window_bounds = array<i64: 8, 128>}, {transform_indices = @transform_4, window_bounds = array<i64: 1, 3, 128>}]} {
    %c0 = arith.constant 0 : index
    %c0_0 = arith.constant 0 : index
    %0 = vector.load %arg1[%c0, %c0_0] : memref<8x32xf32, #tpu.memory_space<vmem>>, vector<8x32xf32>
    %c0_1 = arith.constant 0 : index
    %c0_2 = arith.constant 0 : index
    %1 = vector.load %arg2[%c0_1, %c0_2] : memref<32x128xf32, #tpu.memory_space<vmem>>, vector<32x128xf32>
    %cst = arith.constant dense<0.000000e+00> : vector<8x128xf32>
    %2 = tpu.matmul %0, %1, %cst {dimension_numbers = #tpu.dot_dimension_numbers<[1], [0], [0], [1], [0, 0, 1, 1], [], []>} : vector<8x32xf32>, vector<32x128xf32>, vector<8x128xf32> -> vector<8x128xf32>
    %c0_3 = arith.constant 0 : index
    %c0_4 = arith.constant 0 : index
    %3 = vector.load %arg3[%c0_3, %c0_4] : memref<1x128xf32, #tpu.memory_space<vmem>>, vector<1x128xf32>
    %4 = vector.broadcast %3 : vector<1x128xf32> to vector<8x128xf32>
    %5 = arith.addf %2, %4 : vector<8x128xf32>
    %cst_5 = arith.constant dense<0xFF800000> : vector<8xf32>
    %6 = vector.multi_reduction <maximumf>, %5, %cst_5 [1] : vector<8x128xf32> to vector<8xf32>
    %7 = vector.shape_cast %6 : vector<8xf32> to vector<8x1xf32>
    %8 = vector.broadcast %7 : vector<8x1xf32> to vector<8x128xf32>
    %9 = arith.subf %5, %8 : vector<8x128xf32>
    %10 = math.exp %9 : vector<8x128xf32>
    %cst_6 = arith.constant dense<0.000000e+00> : vector<8xf32>
    %11 = vector.multi_reduction <add>, %10, %cst_6 [1] : vector<8x128xf32> to vector<8xf32>
    %12 = vector.shape_cast %11 : vector<8xf32> to vector<8x1xf32>
    %13 = vector.broadcast %12 : vector<8x1xf32> to vector<8x128xf32>
    %14 = arith.divf %10, %13 : vector<8x128xf32>
    %cst_7 = arith.constant dense<0xFF800000> : vector<8xf32>
    %15 = vector.multi_reduction <maximumf>, %14, %cst_7 [1] : vector<8x128xf32> to vector<8xf32>
    %16 = vector.shape_cast %15 : vector<8xf32> to vector<8x1xf32>
    %17 = vector.broadcast %16 : vector<8x1xf32> to vector<8x128xf32>
    %18 = arith.cmpf oge, %14, %17 : vector<8x128xf32>
    %cst_8 = arith.constant 0xFF800000 : f32
    %19 = vector.broadcast %cst_8 : f32 to vector<8x128xf32>
    %20 = arith.select %18, %19, %14 : vector<8x128xi1>, vector<8x128xf32>
    %cst_9 = arith.constant dense<0xFF800000> : vector<8xf32>
    %21 = vector.multi_reduction <maximumf>, %20, %cst_9 [1] : vector<8x128xf32> to vector<8xf32>
    %22 = vector.shape_cast %21 : vector<8xf32> to vector<8x1xf32>
    %23 = vector.broadcast %22 : vector<8x1xf32> to vector<8x128xf32>
    %24 = arith.cmpf oge, %20, %23 : vector<8x128xf32>
    %cst_10 = arith.constant 0xFF800000 : f32
    %25 = vector.broadcast %cst_10 : f32 to vector<8x128xf32>
    %26 = arith.select %24, %25, %20 : vector<8x128xi1>, vector<8x128xf32>
    %cst_11 = arith.constant dense<0xFF800000> : vector<8xf32>
    %27 = vector.multi_reduction <maximumf>, %26, %cst_11 [1] : vector<8x128xf32> to vector<8xf32>
    %28 = vector.shape_cast %27 : vector<8xf32> to vector<8x1xf32>
    %29 = tpu.iota {dimensions = array<i32: 1>} : vector<8x128xi32>
    %30 = vector.broadcast %28 : vector<8x1xf32> to vector<8x128xf32>
    %31 = arith.cmpf oge, %14, %30 : vector<8x128xf32>
    %c8_i32 = arith.constant 8 : i32
    %32 = vector.broadcast %c8_i32 : i32 to vector<8x128xi32>
    %33 = arith.cmpi slt, %29, %32 : vector<8x128xi32>
    %34 = arith.andi %31, %33 : vector<8x128xi1>
    %cst_12 = arith.constant 1.000000e+00 : f32
    %cst_13 = arith.constant 0.000000e+00 : f32
    %35 = vector.broadcast %cst_12 : f32 to vector<8x128xf32>
    %36 = vector.broadcast %cst_13 : f32 to vector<8x128xf32>
    %37 = arith.select %34, %35, %36 : vector<8x128xi1>, vector<8x128xf32>
    %c8_i32_14 = arith.constant 8 : i32
    %38 = arith.muli %arg0, %c8_i32_14 : i32
    %39 = tpu.iota {dimensions = array<i32: 0>} : vector<8x1xi32>
    %40 = vector.broadcast %38 : i32 to vector<8x1xi32>
    %41 = arith.addi %40, %39 : vector<8x1xi32>
    %c8_i32_15 = arith.constant 8 : i32
    %42 = vector.broadcast %c8_i32_15 : i32 to vector<8x1xi32>
    %43 = arith.cmpi slt, %41, %42 : vector<8x1xi32>
    %cst_16 = arith.constant 1.000000e+00 : f32
    %cst_17 = arith.constant 0.000000e+00 : f32
    %44 = vector.broadcast %cst_16 : f32 to vector<8x1xf32>
    %45 = vector.broadcast %cst_17 : f32 to vector<8x1xf32>
    %46 = arith.select %43, %44, %45 : vector<8x1xi1>, vector<8x1xf32>
    %47 = vector.broadcast %46 : vector<8x1xf32> to vector<8x128xf32>
    %48 = arith.mulf %14, %47 : vector<8x128xf32>
    %49 = vector.broadcast %46 : vector<8x1xf32> to vector<8x128xf32>
    %50 = arith.mulf %37, %49 : vector<8x128xf32>
    %51 = arith.mulf %48, %37 : vector<8x128xf32>
    %c0_18 = arith.constant 0 : index
    %c0_19 = arith.constant 0 : index
    %52 = vector.load %arg4[%c0_18, %c0_19] : memref<8x128xf32, #tpu.memory_space<vmem>>, vector<8x128xf32>
    tpu.vector_store %arg4[%c0_18, %c0_19], %51 {strides = array<i32>} : memref<8x128xf32, #tpu.memory_space<vmem>>, vector<8x128xf32>,
    %cst_20 = arith.constant dense<0.000000e+00> : vector<128xf32>
    %53 = vector.multi_reduction <add>, %51, %cst_20 [0] : vector<8x128xf32> to vector<128xf32>
    %54 = vector.shape_cast %53 : vector<128xf32> to vector<1x128xf32>
    %cst_21 = arith.constant dense<0.000000e+00> : vector<128xf32>
    %55 = vector.multi_reduction <add>, %50, %cst_21 [0] : vector<8x128xf32> to vector<128xf32>
    %56 = vector.shape_cast %55 : vector<128xf32> to vector<1x128xf32>
    %cst_22 = arith.constant dense<0.000000e+00> : vector<128xf32>
    %57 = vector.multi_reduction <add>, %48, %cst_22 [0] : vector<8x128xf32> to vector<128xf32>
    %58 = vector.shape_cast %57 : vector<128xf32> to vector<1x128xf32>
    %59 = tpu.concatenate %54, %56, %58 in 0 : vector<1x128xf32>, vector<1x128xf32>, vector<1x128xf32> -> vector<3x128xf32>
    %60 = vector.shape_cast %59 : vector<3x128xf32> to vector<1x3x128xf32>
    %c0_23 = arith.constant 0 : index
    %c0_24 = arith.constant 0 : index
    %c0_25 = arith.constant 0 : index
    %61 = vector.load %arg5[%c0_23, %c0_24, %c0_25] : memref<1x3x128xf32, #tpu.memory_space<vmem>>, vector<1x3x128xf32>
    tpu.vector_store %arg5[%c0_23, %c0_24, %c0_25], %60 {strides = array<i32>} : memref<1x3x128xf32, #tpu.memory_space<vmem>>, vector<1x3x128xf32>,
    return
  }
  func.func @transform_0(%arg0: i32) -> (i32, i32) {
    %c0_i32 = arith.constant 0 : i32
    %c0_i32_0 = arith.constant 0 : i32
    return %arg0, %c0_i32 : i32, i32
  }
  func.func @transform_1(%arg0: i32) -> (i32, i32) {
    %c0_i32 = arith.constant 0 : i32
    %c0_i32_0 = arith.constant 0 : i32
    %c0_i32_1 = arith.constant 0 : i32
    return %c0_i32, %c0_i32_0 : i32, i32
  }
  func.func @transform_2(%arg0: i32) -> (i32, i32) {
    %c0_i32 = arith.constant 0 : i32
    %c0_i32_0 = arith.constant 0 : i32
    %c0_i32_1 = arith.constant 0 : i32
    return %c0_i32, %c0_i32_0 : i32, i32
  }
  func.func @transform_3(%arg0: i32) -> (i32, i32) {
    %c0_i32 = arith.constant 0 : i32
    %c0_i32_0 = arith.constant 0 : i32
    return %arg0, %c0_i32 : i32, i32
  }
  func.func @transform_4(%arg0: i32) -> (i32, i32, i32) {
    %c0_i32 = arith.constant 0 : i32
    %c0_i32_0 = arith.constant 0 : i32
    %c0_i32_1 = arith.constant 0 : i32
    return %arg0, %c0_i32, %c0_i32_0 : i32, i32, i32
  }
}

</mosaic_0001>

<llo_original>
// kernel: tpu_custom_call.1
$region0: #{tpu_custom_call.1}
  #allocation0 [shape = 'u32[]', space=smem, size = 0x4, offset = 0x4, fixed_abs, tag = 'smem constant byte address 0x4 - core index']
  #allocation1 [shape = 'u32[144,128]{1,0:T(1,128)}', space=vmem, size = 0x12000, scoped, tag = 'internal scratch']
  %s0 = inlined_call_operand.hbm [shape: f32[8,32], index: 0, kind: input, shape index: {}]
  %s1 = inlined_call_operand.hbm [shape: f32[32,128], index: 1, kind: input, shape index: {}]
  %s2 = inlined_call_operand.vmem [shape: f32[1,128], index: 2, kind: input, shape index: {}]
  %s3 = inlined_call_operand.hbm [shape: f32[8,128], index: 3, kind: output, shape index: {0}]
  %s4 = inlined_call_operand.vmem [shape: f32[1,3,128], index: 4, kind: output, shape index: {1}]
  %5 = xla_tuple %s3, %s4
  %s6 = sld [smem:[#allocation0]]
  $region38: #{tpu_custom_call.1} parent=0
    _
  %s8 = ssub.s32 1, %s6
  %s9 = scalar_select 0, %s8, %s6
  $region1: #{tpu_custom_call.1} parent=0
    #allocation2 [shape = 'u8[4096]{0}', space=vmem, size = 0x1000, scoped, tag = 'input window, operand 0, single buffered']
    #allocation3 [shape = 's32[1]{0}', space=sflag, size = 0x4, scoped, tag = 'scoped memory for tpu_custom_call.1']
    #allocation4 [shape = 's32[1]{0}', space=sflag, size = 0x4, scoped, tag = 'scoped memory for tpu_custom_call.1']
    #allocation5 [shape = 'u8[16384]{0}', space=vmem, size = 0x4000, scoped, tag = 'input window, operand 1, single buffered']
    #allocation6 [shape = 's32[1]{0}', space=sflag, size = 0x4, scoped, tag = 'scoped memory for tpu_custom_call.1']
    #allocation7 [shape = 'u8[4096]{0}', space=vmem, size = 0x1000, scoped, tag = 'output window, operand 0, single buffered']
    %10 = vsyncpa [#allocation3], 0
    %11 = vsyncpa [#allocation6], 0
    %12 = vsyncpa [#allocation4], 0
    // Predicated region
    $region2: #{tpu_custom_call.1} parent=1 // pred_check
      _
    $region3: #{tpu_custom_call.1} parent=1 // pred_check_branch
      %14 = sbr.rel (0) target = $region5
    $region4: #{tpu_custom_call.1} parent=1 // pred_region
      %s16 = ssub.s32 128, 128
      %17 = vsyncadd [#allocation3], %s16
      %s19 = sshll.u32 [#allocation2], 4
      %s20 = int_to_ptr.vmem [resolvable:$true] %s19
      %22 = dma.hbm_to_vmem [thread:$0]  %s0, 128, %s20, [#allocation3]
    $region5: #{tpu_custom_call.1} parent=1 // pred_fallthru
      _
    // Predicated region
    $region6: #{tpu_custom_call.1} parent=1 // pred_check
      _
    $region7: #{tpu_custom_call.1} parent=1 // pred_check_branch
      %24 = sbr.rel (0) target = $region9
    $region8: #{tpu_custom_call.1} parent=1 // pred_region
      %s26 = ssub.s32 512, 512
      %27 = vsyncadd [#allocation6], %s26
      %s28 = sshll.u32 [#allocation5], 4
      %s29 = int_to_ptr.vmem [resolvable:$true] %s28
      %34 = dma.hbm_to_vmem [thread:$0]  %s1, 512, %s29, [#allocation6], 128, 128, 8
    $region9: #{tpu_custom_call.1} parent=1 // pred_fallthru
      _
    // Predicated region
    $region10: #{tpu_custom_call.1} parent=1 // pred_check
      _
    $region11: #{tpu_custom_call.1} parent=1 // pred_check_branch
      %36 = sbr.rel (0) target = $region13
    $region12: #{tpu_custom_call.1} parent=1 // pred_region
      _
    $region13: #{tpu_custom_call.1} parent=1 // pred_fallthru
      _
    // Predicated region
    $region14: #{tpu_custom_call.1} parent=1 // pred_check
      _
    $region15: #{tpu_custom_call.1} parent=1 // pred_check_branch
      %38 = sbr.rel (0) target = $region17
    $region16: #{tpu_custom_call.1} parent=1 // pred_region
      %39 = dma.done [#allocation3], 128
    $region17: #{tpu_custom_call.1} parent=1 // pred_fallthru
      _
    // Predicated region
    $region18: #{tpu_custom_call.1} parent=1 // pred_check
      _
    $region19: #{tpu_custom_call.1} parent=1 // pred_check_branch
      %41 = sbr.rel (0) target = $region21
    $region20: #{tpu_custom_call.1} parent=1 // pred_region
      %42 = dma.done [#allocation6], 512
    $region21: #{tpu_custom_call.1} parent=1 // pred_fallthru
      _
    %v43 = vld [vmem:[#allocation2] sm:$0xff]
    %v44 = vld [vmem:[#allocation5] sm:$0xff]
    %v45 = vld [vmem:[#allocation5 + $0x8] sm:$0xff]
    %v46 = vld [vmem:[#allocation5 + $0x10] sm:$0xff]
    %v47 = vld [vmem:[#allocation5 + $0x18] sm:$0xff]
    %v48 = vld [vmem:[%s2] sm:$0x1]
    %v50 = vlaneseq
    %v51 = vshrl.u32 %v50, 7
    %v52 = vsub.s32 0, %v51
    %v53 = vrot.slane %v48, %v52
    %vm55 = vcmask 261120
    %v57 = vsel %vm55, %v43, 0
    %59 = vmatprep.subr.mxu0 0.0
    %60 = vmatpush1.msra.mxu0 0.0
    %61 = vmatprep.subr.mxu0 0.0
    %62 = vmatpush1.msra.mxu0 0.0
    %63 = vmatprep.subr.mxu0 0.0
    %64 = vmatpush1.msra.mxu0 0.0
    %65 = vmatprep.subr.mxu0 0.0
    %66 = vmatpush1.msra.mxu0 0.0
    %67 = vmatprep.subr.mxu0 0.0
    %68 = vmatpush1.msra.mxu0 0.0
    %69 = vmatprep.subr.mxu0 0.0
    %70 = vmatpush1.msra.mxu0 0.0
    %71 = vmatprep.subr.mxu0 0.0
    %72 = vmatpush1.msra.mxu0 0.0
    %73 = vmatprep.subr.mxu0 0.0
    %74 = vmatpush1.msra.mxu0 0.0
    %75 = vmatprep.subr.mxu0 0.0
    %76 = vmatpush1.msra.mxu0 0.0
    %77 = vmatprep.subr.mxu0 0.0
    %78 = vmatpush1.msra.mxu0 0.0
    %79 = vmatprep.subr.mxu0 0.0
    %80 = vmatpush1.msra.mxu0 0.0
    %81 = vmatprep.subr.mxu0 0.0
    %82 = vmatpush1.msra.mxu0 0.0
    %83 = vmatprep.subr.mxu0 0.0
    %84 = vmatpush1.msra.mxu0 %v47
    %85 = vmatprep.subr.mxu0 0.0
    %86 = vmatpush1.msra.mxu0 %v46
    %87 = vmatprep.subr.mxu0 0.0
    %88 = vmatpush1.msra.mxu0 %v45
    %89 = vmatprep.subr.mxu0 0.0
    %90 = vmatpush1.msra.mxu0 %v44
    %91 = vmatprep.subr.mxu0 0.0
    %92 = vmatpush2.msra.mxu0 0.0
    %93 = vmatprep.subr.mxu0 0.0
    %94 = vmatpush2.msra.mxu0 0.0
    %95 = vmatprep.subr.mxu0 0.0
    %96 = vmatpush2.msra.mxu0 0.0
    %97 = vmatprep.subr.mxu0 0.0
    %98 = vmatpush2.msra.mxu0 0.0
    %99 = vmatprep.subr.mxu0 0.0
    %100 = vmatpush2.msra.mxu0 0.0
    %101 = vmatprep.subr.mxu0 0.0
    %102 = vmatpush2.msra.mxu0 0.0
    %103 = vmatprep.subr.mxu0 0.0
    %104 = vmatpush2.msra.mxu0 0.0
    %105 = vmatprep.subr.mxu0 0.0
    %106 = vmatpush2.msra.mxu0 0.0
    %107 = vmatprep.subr.mxu0 0.0
    %108 = vmatpush2.msra.mxu0 0.0
    %109 = vmatprep.subr.mxu0 0.0
    %110 = vmatpush2.msra.mxu0 0.0
    %111 = vmatprep.subr.mxu0 0.0
    %112 = vmatpush2.msra.mxu0 0.0
    %113 = vmatprep.subr.mxu0 0.0
    %114 = vmatpush2.msra.mxu0 0.0
    %115 = vmatprep.subr.mxu0 0.0
    %116 = vmatpush2.msra.mxu0 0.0
    %117 = vmatprep.subr.mxu0 0.0
    %118 = vmatpush2.msra.mxu0 0.0
    %119 = vmatprep.subr.mxu0 0.0
    %120 = vmatpush2.msra.mxu0 0.0
    %121 = vmatprep.subr.mxu0 0.0
    %122 = vmatpush2.msra.mxu0 0.0
    %123 = vmatprep.mubr.f32.mxu0 0.0
    %124 = vmatmul.mubr.f32.gmra.mxu0 %v57
    %v125 = vpop.f32.mrf.mxu0
    %v126 = vadd.f32 %v53, %v125
    %v127 = vpop.f32.mrf.mxu0
    %128 = vdwg.mxu0
    %129 = vmax.xlane.f32.xlu0 %v126
    %v130 = vpop.xlane.xlu0 %129
    %v131 = vsub.f32 %v126, %v130
    %v132 = vmul.f32 %v131, 1.442695
    %v133 = vpow.pop %v132
    %134 = vadd.xlane.f32.xlu0 %v133
    %v135 = vpop.xlane.xlu0 %134
    %v136 = vrcp.pop %v135
    %v137 = vmul.f32 %v133, %v136
    %138 = vmax.xlane.f32.xlu0 %v137
    %v139 = vpop.xlane.xlu0 %138
    %vm140 = vcmp.ge.f32.partialorder %v137, %v139
    %v141 = vsel %vm140, -inf, %v137
    %142 = vmax.xlane.f32.xlu0 %v141
    %v143 = vpop.xlane.xlu0 %142
    %vm144 = vcmp.ge.f32.partialorder %v141, %v143
    %v145 = vsel %vm144, -inf, %v141
    %146 = vmax.xlane.f32.xlu0 %v145
    %v147 = vpop.xlane.xlu0 %146
    %v148 = vlaneseq
    %v149 = vand.u32 %v148, 127
    %vm150 = vcmp.ge.f32.partialorder %v137, %v147
    %vm151 = vcmp.lt.s32.totalorder %v149, 8
    %vm152 = vmand %vm150, %vm151
    %v153 = vsel %vm152, 1.0, 0.0
    %s154 = smul.u32 0, 8
    %v155 = vlaneseq
    %v156 = vshrl.u32 %v155, 7
    %v157 = vstv %s154
    %v158 = vadd.s32 %v157, %v156
    %vm159 = vcmp.lt.s32.totalorder %v158, 8
    %v160 = vsel %vm159, 1.0, 0.0
    %v161 = vmul.f32 %v137, %v160
    %v162 = vmul.f32 %v153, %v160
    %v163 = vmul.f32 %v161, %v153
    %164 = vst [vmem:[#allocation7] sm:$0xff] %v163
    %v165 = vrot.slane %v163, 4
    %v166 = vadd.f32 %v163, %v165
    %v167 = vrot.slane %v166, 2
    %v168 = vadd.f32 %v166, %v167
    %v169 = vrot.slane %v168, 1
    %v170 = vadd.f32 %v168, %v169
    %v171 = vrot.slane %v162, 4
    %v172 = vadd.f32 %v162, %v171
    %v173 = vrot.slane %v172, 2
    %v174 = vadd.f32 %v172, %v173
    %v175 = vrot.slane %v174, 1
    %v176 = vadd.f32 %v174, %v175
    %v177 = vrot.slane %v161, 4
    %v178 = vadd.f32 %v161, %v177
    %v179 = vrot.slane %v178, 2
    %v180 = vadd.f32 %v178, %v179
    %v181 = vrot.slane %v180, 1
    %v182 = vadd.f32 %v180, %v181
    %vm183 = vcmask 1040384
    %v184 = vsel %vm183, %v170, %v176
    %vm185 = vcmask 1041408
    %v186 = vsel %vm185, %v184, %v182
    %187 = vst [vmem:[%s4] sm:$0x7] %v186
    // Predicated region
    $region22: #{tpu_custom_call.1} parent=1 // pred_check
      _
    $region23: #{tpu_custom_call.1} parent=1 // pred_check_branch
      %189 = sbr.rel (0) target = $region25
    $region24: #{tpu_custom_call.1} parent=1 // pred_region
      %s191 = ssub.s32 128, 128
      %192 = vsyncadd [#allocation4], %s191
      %s194 = sshll.u32 [#allocation7], 4
      %s195 = int_to_ptr.vmem [resolvable:$true] %s194
      %197 = dma.vmem_to_hbm [thread:$0]  %s195, 128, %s3, [#allocation4]
    $region25: #{tpu_custom_call.1} parent=1 // pred_fallthru
      _
    // Predicated region
    $region26: #{tpu_custom_call.1} parent=1 // pred_check
      _
    $region27: #{tpu_custom_call.1} parent=1 // pred_check_branch
      %199 = sbr.rel (0) target = $region29
    $region28: #{tpu_custom_call.1} parent=1 // pred_region
      _
    $region29: #{tpu_custom_call.1} parent=1 // pred_fallthru
      _
    // Predicated region
    $region30: #{tpu_custom_call.1} parent=1 // pred_check
      _
    $region31: #{tpu_custom_call.1} parent=1 // pred_check_branch
      %201 = sbr.rel (0) target = $region33
    $region32: #{tpu_custom_call.1} parent=1 // pred_region
      %202 = dma.done [#allocation4], 128
    $region33: #{tpu_custom_call.1} parent=1 // pred_fallthru
      _
    // Predicated region
    $region34: #{tpu_custom_call.1} parent=1 // pred_check
      _
    $region35: #{tpu_custom_call.1} parent=1 // pred_check_branch
      %204 = sbr.rel (0) target = $region37
    $region36: #{tpu_custom_call.1} parent=1 // pred_region
      _
    $region37: #{tpu_custom_call.1} parent=1 // pred_fallthru
      _
    %205 = vsyncpa [#allocation3], 1
    %206 = vsyncpa [#allocation6], 1
    %207 = vsyncpa [#allocation4], 1

</llo_original>
